<compile_context>
chip_gen: v7x
topology: tpu7x:2x2x1
jax: 0.10.0
libtpu: 0.0.40
codegen_flags: <defaults>
</compile_context>

<pallas_src>
import functools

import jax
import jax.numpy as jnp
from jax import lax
from jax.experimental import pallas as pl
from jax.experimental.pallas import tpu as pltpu

# ~2 MiB of f32 per block (512 * 1024 elements).
_TARGET_BLOCK_ELEMS = 512 * 1024
# Preferred lane-dense widths (multiples of 128); pick the largest dividing n.
_COL_CANDIDATES = (4096, 2048, 1024, 512, 256, 128)


def _dropout_kernel(seed_ref, x_ref, o_ref, *, threshold, block_rows, total_cols):
    """One (block_rows, cols) tile: hash global element index -> keep/drop."""
    shape = x_ref.shape
    seed = seed_ref[0].astype(jnp.uint32)

    # Global (row, col) ids for this tile -> unique per-element counter.
    base_row = (pl.program_id(0) * block_rows).astype(jnp.uint32)
    row_ids = lax.broadcasted_iota(jnp.uint32, shape, 0) + base_row
    col_ids = lax.broadcasted_iota(jnp.uint32, shape, 1)
    h = row_ids * jnp.uint32(total_cols) + col_ids

    # Mix in the seed, then murmur3-style fmix32 finalizer (VPU-only filler).
    h = h * jnp.uint32(0x9E3779B1) + seed * jnp.uint32(0x85EBCA77)
    h = h ^ (h >> 16)
    h = h * jnp.uint32(0x85EBCA6B)
    h = h ^ (h >> 13)
    h = h * jnp.uint32(0xC2B2AE35)
    h = h ^ (h >> 16)

    # keep iff uniform-u32 < (1 - p) * 2^32   <=>  bernoulli(1 - p)
    keep = h < jnp.uint32(threshold)
    x = x_ref[...]
    o_ref[...] = jnp.where(keep, x, jnp.zeros_like(x)).astype(o_ref.dtype)


def dropout(x, p=0.5, *, seed=0, training=True):
    """Pallas implementation of the reference Dropout.forward."""
    if not training or p == 0.0:
        return x

    orig_shape = x.shape
    n = x.size
    if n == 0:
        return x

    flat = x.reshape(-1)

    # Choose a lane-dense width.  Prefer an exact divisor of n (no pad copy,
    # no tail slice); otherwise pad minimally to a multiple of 1024.
    cols = None
    for c in _COL_CANDIDATES:
        if n % c == 0:
            cols = c
            break
    if cols is None:
        cols = 1024
        flat = jnp.pad(flat, (0, (-n) % cols))

    total = flat.shape[0]
    rows = total // cols
    x2d = flat.reshape(rows, cols)

    # Block rows: multiple of 8 targeting ~2 MiB blocks, or the full row
    # extent (always a legal block shape).  Ragged last block is fine.
    br = max(8, (_TARGET_BLOCK_ELEMS // cols) // 8 * 8)
    if br >= rows:
        br = rows
    grid = (pl.cdiv(rows, br),)

    # Keep-probability threshold on uint32 random bits.  (Clamp means the
    # keep-prob is at most 1 - 2^-32 for tiny p; negligible.)
    threshold = min(int(round((1.0 - float(p)) * 2.0**32)), 2**32 - 1)
    seed_arr = jnp.array([seed], dtype=jnp.int32)

    kernel = functools.partial(
        _dropout_kernel, threshold=threshold, block_rows=br, total_cols=cols)

    out2d = pl.pallas_call(
        kernel,
        out_shape=jax.ShapeDtypeStruct((rows, cols), x.dtype),
        grid_spec=pltpu.PrefetchScalarGridSpec(
            num_scalar_prefetch=1,
            grid=grid,
            in_specs=[pl.BlockSpec((br, cols), lambda i, seed: (i, 0))],
            out_specs=pl.BlockSpec((br, cols), lambda i, seed: (i, 0)),
        ),
        compiler_params=pltpu.CompilerParams(
            dimension_semantics=("parallel",),   # independent tiles -> both v7x TCs
            vmem_limit_bytes=32 * 1024 * 1024,   # headroom over v5e's 16 MiB default
        ),
    )(seed_arr, x2d)

    out = out2d.reshape(-1)
    if out.shape[0] != n:        # only when padding was needed
        out = out[:n]
    return out.reshape(orig_shape)


if __name__ == "__main__":
    key = jax.random.PRNGKey(0)
    # Small NCHW-like input consistent with an elementwise dropout layer.
    x = jax.random.normal(key, (2, 4, 16, 16), dtype=jnp.float32)

    p = 0.5
    y_train = dropout(x, p=p, seed=42, training=True)
    y_eval = dropout(x, p=p, seed=42, training=False)

    jax.block_until_ready(y_train)
    jax.block_until_ready(y_eval)

    # Sanity checks: shapes/dtypes preserved; surviving elements untouched;
    # eval mode is identity; keep fraction ~ (1 - p).
    assert y_train.shape == x.shape and y_train.dtype == x.dtype
    assert bool(jnp.all(y_eval == x))
    kept = y_train != 0
    assert bool(jnp.all(jnp.where(kept, y_train, x) == x))
    keep_frac = float(jnp.mean(kept.astype(jnp.float32)))
    assert 0.3 < keep_frac < 0.7, f"unexpected keep fraction {keep_frac}"

    print("KERNEL_OK")
</pallas_src>

<mosaic_0001>
module attributes {stable_mosaic.version = 11 : i64} {
  func.func @_dropout_kernel(%arg0: i32, %arg1: memref<1xi32, #tpu.memory_space<smem>>, %arg2: memref<1x2048xf32, #tpu.memory_space<vmem>>, %arg3: memref<1x2048xf32, #tpu.memory_space<vmem>>) attributes {dimension_semantics = [#tpu.dimension_semantics<parallel>], iteration_bounds = array<i64: 1>, scalar_prefetch = 1 : i64, scratch_operands = 0 : i64, tpu.core_type = #tpu.core_type<tc>, window_params = [{transform_indices = @transform_0, window_bounds = array<i64: 1, 2048>}, {transform_indices = @transform_1, window_bounds = array<i64: 1, 2048>}]} {
    %c0 = arith.constant 0 : index
    %0 = memref.load %arg1[%c0] : memref<1xi32, #tpu.memory_space<smem>>
    %c1_i32 = arith.constant 1 : i32
    %1 = arith.muli %arg0, %c1_i32 : i32
    %2 = tpu.iota {dimensions = array<i32: 0>} : vector<1x2048xi32>
    %3 = vector.broadcast %1 : i32 to vector<1x2048xi32>
    %4 = arith.addi %2, %3 : vector<1x2048xi32>
    %5 = tpu.iota {dimensions = array<i32: 1>} : vector<1x2048xi32>
    %c2048_i32 = arith.constant 2048 : i32
    %6 = vector.broadcast %c2048_i32 : i32 to vector<1x2048xi32>
    %7 = arith.muli %4, %6 : vector<1x2048xi32>
    %8 = arith.addi %7, %5 : vector<1x2048xi32>
    %c-1640531535_i32 = arith.constant -1640531535 : i32
    %9 = vector.broadcast %c-1640531535_i32 : i32 to vector<1x2048xi32>
    %10 = arith.muli %8, %9 : vector<1x2048xi32>
    %c-2048144777_i32 = arith.constant -2048144777 : i32
    %11 = arith.muli %0, %c-2048144777_i32 : i32
    %12 = vector.broadcast %11 : i32 to vector<1x2048xi32>
    %13 = arith.addi %10, %12 : vector<1x2048xi32>
    %c16_i32 = arith.constant 16 : i32
    %14 = vector.broadcast %c16_i32 : i32 to vector<1x2048xi32>
    %15 = arith.shrui %13, %14 : vector<1x2048xi32>
    %16 = arith.xori %13, %15 : vector<1x2048xi32>
    %c-2048144789_i32 = arith.constant -2048144789 : i32
    %17 = vector.broadcast %c-2048144789_i32 : i32 to vector<1x2048xi32>
    %18 = arith.muli %16, %17 : vector<1x2048xi32>
    %c13_i32 = arith.constant 13 : i32
    %19 = vector.broadcast %c13_i32 : i32 to vector<1x2048xi32>
    %20 = arith.shrui %18, %19 : vector<1x2048xi32>
    %21 = arith.xori %18, %20 : vector<1x2048xi32>
    %c-1028477387_i32 = arith.constant -1028477387 : i32
    %22 = vector.broadcast %c-1028477387_i32 : i32 to vector<1x2048xi32>
    %23 = arith.muli %21, %22 : vector<1x2048xi32>
    %c16_i32_0 = arith.constant 16 : i32
    %24 = vector.broadcast %c16_i32_0 : i32 to vector<1x2048xi32>
    %25 = arith.shrui %23, %24 : vector<1x2048xi32>
    %26 = arith.xori %23, %25 : vector<1x2048xi32>
    %c-2147483648_i32 = arith.constant -2147483648 : i32
    %27 = vector.broadcast %c-2147483648_i32 : i32 to vector<1x2048xi32>
    %28 = arith.cmpi ult, %26, %27 : vector<1x2048xi32>
    %c0_1 = arith.constant 0 : index
    %c0_2 = arith.constant 0 : index
    %29 = vector.load %arg2[%c0_1, %c0_2] : memref<1x2048xf32, #tpu.memory_space<vmem>>, vector<1x2048xf32>
    %cst = arith.constant 0.000000e+00 : f32
    %30 = vector.broadcast %cst : f32 to vector<1x2048xf32>
    %31 = arith.select %28, %29, %30 : vector<1x2048xi1>, vector<1x2048xf32>
    %c0_3 = arith.constant 0 : index
    %c0_4 = arith.constant 0 : index
    %32 = vector.load %arg3[%c0_3, %c0_4] : memref<1x2048xf32, #tpu.memory_space<vmem>>, vector<1x2048xf32>
    tpu.vector_store %arg3[%c0_3, %c0_4], %31 {strides = array<i32>} : memref<1x2048xf32, #tpu.memory_space<vmem>>, vector<1x2048xf32>,
    return
  }
  func.func @transform_0(%arg0: i32, %arg1: memref<1xi32, #tpu.memory_space<smem>>) -> (i32, i32) {
    %c0_i32 = arith.constant 0 : i32
    %c0_i32_0 = arith.constant 0 : i32
    return %arg0, %c0_i32 : i32, i32
  }
  func.func @transform_1(%arg0: i32, %arg1: memref<1xi32, #tpu.memory_space<smem>>) -> (i32, i32) {
    %c0_i32 = arith.constant 0 : i32
    %c0_i32_0 = arith.constant 0 : i32
    return %arg0, %c0_i32 : i32, i32
  }
}

</mosaic_0001>

<llo_original>
// kernel: tpu_custom_call.1
$region0: #{tpu_custom_call.1}
  #allocation0 [shape = 'u32[]', space=smem, size = 0x4, offset = 0x4, fixed_abs, tag = 'smem constant byte address 0x4 - core index']
  #allocation1 [shape = 'u32[144,128]{1,0:T(1,128)}', space=vmem, size = 0x12000, scoped, tag = 'internal scratch']
  #allocation2 [shape = 's32[1]{0}', space=sflag, size = 0x4, scoped, tag = 'scoped memory for tpu_custom_call.1']
  #allocation3 [shape = 's32[1]{0:T(128)S(6)}', space=smem, size = 0x200, scoped, tag = 'prefetched SMEM operand 0']
  %s0 = inlined_call_operand.<no memory space> [shape: s32[1], index: 0, kind: input, shape index: {}]
  %s1 = inlined_call_operand.hbm [shape: f32[1,2048], index: 1, kind: input, shape index: {}]
  %s2 = inlined_call_operand.hbm [shape: f32[1,2048], index: 2, kind: output, shape index: {}]
  %s3 = sld [smem:[#allocation0]]
  $region18: #{tpu_custom_call.1} parent=0
    _
  %s5 = ssub.s32 1, %s3
  %s6 = scalar_select 0, %s5, %s3
  %7 = sst [smem:[#allocation3]] %s0
  $region1: #{tpu_custom_call.1} parent=0
    #allocation4 [shape = 'u8[8192]{0}', space=vmem, size = 0x2000, scoped, tag = 'input window, operand 1, single buffered']
    #allocation5 [shape = 's32[1]{0}', space=sflag, size = 0x4, scoped, tag = 'scoped memory for tpu_custom_call.1']
    #allocation6 [shape = 's32[1]{0}', space=sflag, size = 0x4, scoped, tag = 'scoped memory for tpu_custom_call.1']
    #allocation7 [shape = 'u8[8192]{0}', space=vmem, size = 0x2000, scoped, tag = 'output window, operand 0, single buffered']
    %8 = vsyncpa [#allocation5], 0
    %9 = vsyncpa [#allocation6], 0
    // Predicated region
    $region2: #{tpu_custom_call.1} parent=1 // pred_check
      _
    $region3: #{tpu_custom_call.1} parent=1 // pred_check_branch
      %11 = sbr.rel (0) target = $region5
    $region4: #{tpu_custom_call.1} parent=1 // pred_region
      %s13 = ssub.s32 256, 256
      %14 = vsyncadd [#allocation5], %s13
      %s16 = sshll.u32 [#allocation4], 4
      %s17 = int_to_ptr.vmem [resolvable:$true] %s16
      %19 = dma.hbm_to_vmem [thread:$0]  %s1, 256, %s17, [#allocation5]
    $region5: #{tpu_custom_call.1} parent=1 // pred_fallthru
      _
    // Predicated region
    $region6: #{tpu_custom_call.1} parent=1 // pred_check
      _
    $region7: #{tpu_custom_call.1} parent=1 // pred_check_branch
      %21 = sbr.rel (0) target = $region9
    $region8: #{tpu_custom_call.1} parent=1 // pred_region
      %22 = dma.done [#allocation5], 256
    $region9: #{tpu_custom_call.1} parent=1 // pred_fallthru
      _
    %s23 = sld [smem:[#allocation3]]
    %v24 = vlaneseq
    %v25 = vshrl.u32 %v24, 7
    %v26 = vstv 0
    %v27 = vadd.s32 %v25, %v26
    %v28 = vlaneseq
    %v29 = vand.u32 %v28, 127
    %v30 = vadd.s32 %v29, 128
    %v31 = vadd.s32 %v29, 256
    %v32 = vadd.s32 %v29, 384
    %v33 = vadd.s32 %v29, 512
    %v34 = vadd.s32 %v29, 640
    %v35 = vadd.s32 %v29, 768
    %v36 = vadd.s32 %v29, 896
    %v37 = vadd.s32 %v29, 1024
    %v38 = vadd.s32 %v29, 1152
    %v39 = vadd.s32 %v29, 1280
    %v40 = vadd.s32 %v29, 1408
    %v41 = vadd.s32 %v29, 1536
    %v42 = vadd.s32 %v29, 1664
    %v43 = vadd.s32 %v29, 1792
    %v44 = vadd.s32 %v29, 1920
    %v45 = vmul.u32 %v27, 2048
    %v46 = vadd.s32 %v45, %v29
    %v47 = vadd.s32 %v45, %v30
    %v48 = vadd.s32 %v45, %v31
    %v49 = vadd.s32 %v45, %v32
    %v50 = vadd.s32 %v45, %v33
    %v51 = vadd.s32 %v45, %v34
    %v52 = vadd.s32 %v45, %v35
    %v53 = vadd.s32 %v45, %v36
    %v54 = vadd.s32 %v45, %v37
    %v55 = vadd.s32 %v45, %v38
    %v56 = vadd.s32 %v45, %v39
    %v57 = vadd.s32 %v45, %v40
    %v58 = vadd.s32 %v45, %v41
    %v59 = vadd.s32 %v45, %v42
    %v60 = vadd.s32 %v45, %v43
    %v61 = vadd.s32 %v45, %v44
    %v62 = vmul.u32 %v46, 2654435761
    %v63 = vmul.u32 %v47, 2654435761
    %v64 = vmul.u32 %v48, 2654435761
    %v65 = vmul.u32 %v49, 2654435761
    %v66 = vmul.u32 %v50, 2654435761
    %v67 = vmul.u32 %v51, 2654435761
    %v68 = vmul.u32 %v52, 2654435761
    %v69 = vmul.u32 %v53, 2654435761
    %v70 = vmul.u32 %v54, 2654435761
    %v71 = vmul.u32 %v55, 2654435761
    %v72 = vmul.u32 %v56, 2654435761
    %v73 = vmul.u32 %v57, 2654435761
    %v74 = vmul.u32 %v58, 2654435761
    %v75 = vmul.u32 %v59, 2654435761
    %v76 = vmul.u32 %v60, 2654435761
    %v77 = vmul.u32 %v61, 2654435761
    %s78 = smul.u32 %s23, 2246822519
    %v79 = vstv %s78
    %v80 = vadd.s32 %v62, %v79
    %v81 = vadd.s32 %v63, %v79
    %v82 = vadd.s32 %v64, %v79
    %v83 = vadd.s32 %v65, %v79
    %v84 = vadd.s32 %v66, %v79
    %v85 = vadd.s32 %v67, %v79
    %v86 = vadd.s32 %v68, %v79
    %v87 = vadd.s32 %v69, %v79
    %v88 = vadd.s32 %v70, %v79
    %v89 = vadd.s32 %v71, %v79
    %v90 = vadd.s32 %v72, %v79
    %v91 = vadd.s32 %v73, %v79
    %v92 = vadd.s32 %v74, %v79
    %v93 = vadd.s32 %v75, %v79
    %v94 = vadd.s32 %v76, %v79
    %v95 = vadd.s32 %v77, %v79
    %v96 = vshrl.u32 %v80, 16
    %v97 = vshrl.u32 %v81, 16
    %v98 = vshrl.u32 %v82, 16
    %v99 = vshrl.u32 %v83, 16
    %v100 = vshrl.u32 %v84, 16
    %v101 = vshrl.u32 %v85, 16
    %v102 = vshrl.u32 %v86, 16
    %v103 = vshrl.u32 %v87, 16
    %v104 = vshrl.u32 %v88, 16
    %v105 = vshrl.u32 %v89, 16
    %v106 = vshrl.u32 %v90, 16
    %v107 = vshrl.u32 %v91, 16
    %v108 = vshrl.u32 %v92, 16
    %v109 = vshrl.u32 %v93, 16
    %v110 = vshrl.u32 %v94, 16
    %v111 = vshrl.u32 %v95, 16
    %v112 = vxor.u32 %v80, %v96
    %v113 = vxor.u32 %v81, %v97
    %v114 = vxor.u32 %v82, %v98
    %v115 = vxor.u32 %v83, %v99
    %v116 = vxor.u32 %v84, %v100
    %v117 = vxor.u32 %v85, %v101
    %v118 = vxor.u32 %v86, %v102
    %v119 = vxor.u32 %v87, %v103
    %v120 = vxor.u32 %v88, %v104
    %v121 = vxor.u32 %v89, %v105
    %v122 = vxor.u32 %v90, %v106
    %v123 = vxor.u32 %v91, %v107
    %v124 = vxor.u32 %v92, %v108
    %v125 = vxor.u32 %v93, %v109
    %v126 = vxor.u32 %v94, %v110
    %v127 = vxor.u32 %v95, %v111
    %v128 = vmul.u32 %v112, 2246822507
    %v129 = vmul.u32 %v113, 2246822507
    %v130 = vmul.u32 %v114, 2246822507
    %v131 = vmul.u32 %v115, 2246822507
    %v132 = vmul.u32 %v116, 2246822507
    %v133 = vmul.u32 %v117, 2246822507
    %v134 = vmul.u32 %v118, 2246822507
    %v135 = vmul.u32 %v119, 2246822507
    %v136 = vmul.u32 %v120, 2246822507
    %v137 = vmul.u32 %v121, 2246822507
    %v138 = vmul.u32 %v122, 2246822507
    %v139 = vmul.u32 %v123, 2246822507
    %v140 = vmul.u32 %v124, 2246822507
    %v141 = vmul.u32 %v125, 2246822507
    %v142 = vmul.u32 %v126, 2246822507
    %v143 = vmul.u32 %v127, 2246822507
    %v144 = vshrl.u32 %v128, 13
    %v145 = vshrl.u32 %v129, 13
    %v146 = vshrl.u32 %v130, 13
    %v147 = vshrl.u32 %v131, 13
    %v148 = vshrl.u32 %v132, 13
    %v149 = vshrl.u32 %v133, 13
    %v150 = vshrl.u32 %v134, 13
    %v151 = vshrl.u32 %v135, 13
    %v152 = vshrl.u32 %v136, 13
    %v153 = vshrl.u32 %v137, 13
    %v154 = vshrl.u32 %v138, 13
    %v155 = vshrl.u32 %v139, 13
    %v156 = vshrl.u32 %v140, 13
    %v157 = vshrl.u32 %v141, 13
    %v158 = vshrl.u32 %v142, 13
    %v159 = vshrl.u32 %v143, 13
    %v160 = vxor.u32 %v128, %v144
    %v161 = vxor.u32 %v129, %v145
    %v162 = vxor.u32 %v130, %v146
    %v163 = vxor.u32 %v131, %v147
    %v164 = vxor.u32 %v132, %v148
    %v165 = vxor.u32 %v133, %v149
    %v166 = vxor.u32 %v134, %v150
    %v167 = vxor.u32 %v135, %v151
    %v168 = vxor.u32 %v136, %v152
    %v169 = vxor.u32 %v137, %v153
    %v170 = vxor.u32 %v138, %v154
    %v171 = vxor.u32 %v139, %v155
    %v172 = vxor.u32 %v140, %v156
    %v173 = vxor.u32 %v141, %v157
    %v174 = vxor.u32 %v142, %v158
    %v175 = vxor.u32 %v143, %v159
    %v176 = vmul.u32 %v160, 3266489909
    %v177 = vmul.u32 %v161, 3266489909
    %v178 = vmul.u32 %v162, 3266489909
    %v179 = vmul.u32 %v163, 3266489909
    %v180 = vmul.u32 %v164, 3266489909
    %v181 = vmul.u32 %v165, 3266489909
    %v182 = vmul.u32 %v166, 3266489909
    %v183 = vmul.u32 %v167, 3266489909
    %v184 = vmul.u32 %v168, 3266489909
    %v185 = vmul.u32 %v169, 3266489909
    %v186 = vmul.u32 %v170, 3266489909
    %v187 = vmul.u32 %v171, 3266489909
    %v188 = vmul.u32 %v172, 3266489909
    %v189 = vmul.u32 %v173, 3266489909
    %v190 = vmul.u32 %v174, 3266489909
    %v191 = vmul.u32 %v175, 3266489909
    %v192 = vshrl.u32 %v176, 16
    %v193 = vshrl.u32 %v177, 16
    %v194 = vshrl.u32 %v178, 16
    %v195 = vshrl.u32 %v179, 16
    %v196 = vshrl.u32 %v180, 16
    %v197 = vshrl.u32 %v181, 16
    %v198 = vshrl.u32 %v182, 16
    %v199 = vshrl.u32 %v183, 16
    %v200 = vshrl.u32 %v184, 16
    %v201 = vshrl.u32 %v185, 16
    %v202 = vshrl.u32 %v186, 16
    %v203 = vshrl.u32 %v187, 16
    %v204 = vshrl.u32 %v188, 16
    %v205 = vshrl.u32 %v189, 16
    %v206 = vshrl.u32 %v190, 16
    %v207 = vshrl.u32 %v191, 16
    %v208 = vxor.u32 %v176, %v192
    %v209 = vxor.u32 %v177, %v193
    %v210 = vxor.u32 %v178, %v194
    %v211 = vxor.u32 %v179, %v195
    %v212 = vxor.u32 %v180, %v196
    %v213 = vxor.u32 %v181, %v197
    %v214 = vxor.u32 %v182, %v198
    %v215 = vxor.u32 %v183, %v199
    %v216 = vxor.u32 %v184, %v200
    %v217 = vxor.u32 %v185, %v201
    %v218 = vxor.u32 %v186, %v202
    %v219 = vxor.u32 %v187, %v203
    %v220 = vxor.u32 %v188, %v204
    %v221 = vxor.u32 %v189, %v205
    %v222 = vxor.u32 %v190, %v206
    %v223 = vxor.u32 %v191, %v207
    %vm224 = vcmp.lt.u32.totalorder %v208, 2147483648
    %vm225 = vcmp.lt.u32.totalorder %v209, 2147483648
    %vm226 = vcmp.lt.u32.totalorder %v210, 2147483648
    %vm227 = vcmp.lt.u32.totalorder %v211, 2147483648
    %vm228 = vcmp.lt.u32.totalorder %v212, 2147483648
    %vm229 = vcmp.lt.u32.totalorder %v213, 2147483648
    %vm230 = vcmp.lt.u32.totalorder %v214, 2147483648
    %vm231 = vcmp.lt.u32.totalorder %v215, 2147483648
    %vm232 = vcmp.lt.u32.totalorder %v216, 2147483648
    %vm233 = vcmp.lt.u32.totalorder %v217, 2147483648
    %vm234 = vcmp.lt.u32.totalorder %v218, 2147483648
    %vm235 = vcmp.lt.u32.totalorder %v219, 2147483648
    %vm236 = vcmp.lt.u32.totalorder %v220, 2147483648
    %vm237 = vcmp.lt.u32.totalorder %v221, 2147483648
    %vm238 = vcmp.lt.u32.totalorder %v222, 2147483648
    %vm239 = vcmp.lt.u32.totalorder %v223, 2147483648
    %v240 = vld [vmem:[#allocation4] sm:$0xff]
    %v241 = vld [vmem:[#allocation4 + $0x8] sm:$0xff]
    %v244 = vlaneseq
    %v245 = vshrl.u32 %v244, 7
    %v246 = vsub.s32 0, %v245
    %v247 = vrot.slane %v240, %v246
    %v248 = vlaneseq
    %v249 = vshrl.u32 %v248, 7
    %v250 = vsub.s32 1, %v249
    %v251 = vrot.slane %v240, %v250
    %v252 = vlaneseq
    %v253 = vshrl.u32 %v252, 7
    %v254 = vsub.s32 2, %v253
    %v255 = vrot.slane %v240, %v254
    %v256 = vlaneseq
    %v257 = vshrl.u32 %v256, 7
    %v258 = vsub.s32 3, %v257
    %v259 = vrot.slane %v240, %v258
    %v260 = vlaneseq
    %v261 = vshrl.u32 %v260, 7
    %v262 = vsub.s32 4, %v261
    %v263 = vrot.slane %v240, %v262
    %v264 = vlaneseq
    %v265 = vshrl.u32 %v264, 7
    %v266 = vsub.s32 5, %v265
    %v267 = vrot.slane %v240, %v266
    %v268 = vlaneseq
    %v269 = vshrl.u32 %v268, 7
    %v270 = vsub.s32 6, %v269
    %v271 = vrot.slane %v240, %v270
    %v272 = vlaneseq
    %v273 = vshrl.u32 %v272, 7
    %v274 = vsub.s32 7, %v273
    %v275 = vrot.slane %v240, %v274
    %v276 = vlaneseq
    %v277 = vshrl.u32 %v276, 7
    %v278 = vsub.s32 0, %v277
    %v279 = vrot.slane %v241, %v278
    %v280 = vlaneseq
    %v281 = vshrl.u32 %v280, 7
    %v282 = vsub.s32 1, %v281
    %v283 = vrot.slane %v241, %v282
    %v284 = vlaneseq
    %v285 = vshrl.u32 %v284, 7
    %v286 = vsub.s32 2, %v285
    %v287 = vrot.slane %v241, %v286
    %v288 = vlaneseq
    %v289 = vshrl.u32 %v288, 7
    %v290 = vsub.s32 3, %v289
    %v291 = vrot.slane %v241, %v290
    %v292 = vlaneseq
    %v293 = vshrl.u32 %v292, 7
    %v294 = vsub.s32 4, %v293
    %v295 = vrot.slane %v241, %v294
    %v296 = vlaneseq
    %v297 = vshrl.u32 %v296, 7
    %v298 = vsub.s32 5, %v297
    %v299 = vrot.slane %v241, %v298
    %v300 = vlaneseq
    %v301 = vshrl.u32 %v300, 7
    %v302 = vsub.s32 6, %v301
    %v303 = vrot.slane %v241, %v302
    %v304 = vlaneseq
    %v305 = vshrl.u32 %v304, 7
    %v306 = vsub.s32 7, %v305
    %v307 = vrot.slane %v241, %v306
    %v324 = vsel %vm224, %v247, 0.0
    %v325 = vsel %vm225, %v251, 0.0
    %v326 = vsel %vm226, %v255, 0.0
    %v327 = vsel %vm227, %v259, 0.0
    %v328 = vsel %vm228, %v263, 0.0
    %v329 = vsel %vm229, %v267, 0.0
    %v330 = vsel %vm230, %v271, 0.0
    %v331 = vsel %vm231, %v275, 0.0
    %v332 = vsel %vm232, %v279, 0.0
    %v333 = vsel %vm233, %v283, 0.0
    %v334 = vsel %vm234, %v287, 0.0
    %v335 = vsel %vm235, %v291, 0.0
    %v336 = vsel %vm236, %v295, 0.0
    %v337 = vsel %vm237, %v299, 0.0
    %v338 = vsel %vm238, %v303, 0.0
    %v339 = vsel %vm239, %v307, 0.0
    %v356 = vcombine.low %v324, %v325
    %v357 = vcombine.low %v326, %v327
    %v358 = vcombine.low %v328, %v329
    %v359 = vcombine.low %v330, %v331
    %v361 = vunpack.c.l.s4 1966171168
    %v362 = vunpack.c.0.s8 %v361
    %v363 = vlaneseq
    %v364 = vshrl.u32 %v363, 7
    %v365 = vsub.s32 %v362, %v364
    %v366 = vrot.slane %v356, %v365
    %v368 = vunpack.c.l.s4 1966171168
    %v369 = vunpack.c.0.s8 %v368
    %v370 = vlaneseq
    %v371 = vshrl.u32 %v370, 7
    %v372 = vsub.s32 %v369, %v371
    %v373 = vrot.slane %v357, %v372
    %v375 = vunpack.c.l.s4 1966171168
    %v376 = vunpack.c.0.s8 %v375
    %v377 = vlaneseq
    %v378 = vshrl.u32 %v377, 7
    %v379 = vsub.s32 %v376, %v378
    %v380 = vrot.slane %v358, %v379
    %v382 = vunpack.c.l.s4 1966171168
    %v383 = vunpack.c.0.s8 %v382
    %v384 = vlaneseq
    %v385 = vshrl.u32 %v384, 7
    %v386 = vsub.s32 %v383, %v385
    %v387 = vrot.slane %v359, %v386
    %v388 = vcombine.low %v366, %v373
    %v389 = vcombine.low %v380, %v387
    %v391 = vunpack.c.l.s4 1966171168
    %v392 = vunpack.c.0.s8 %v391
    %v393 = vlaneseq
    %v394 = vshrl.u32 %v393, 7
    %v395 = vsub.s32 %v392, %v394
    %v396 = vrot.slane %v388, %v395
    %v398 = vunpack.c.l.s4 1966171168
    %v399 = vunpack.c.0.s8 %v398
    %v400 = vlaneseq
    %v401 = vshrl.u32 %v400, 7
    %v402 = vsub.s32 %v399, %v401
    %v403 = vrot.slane %v389, %v402
    %v404 = vcombine.low %v396, %v403
    %v405 = vcombine.low %v332, %v333
    %v406 = vcombine.low %v334, %v335
    %v407 = vcombine.low %v336, %v337
    %v408 = vcombine.low %v338, %v339
    %v410 = vunpack.c.l.s4 1966171168
    %v411 = vunpack.c.0.s8 %v410
    %v412 = vlaneseq
    %v413 = vshrl.u32 %v412, 7
    %v414 = vsub.s32 %v411, %v413
    %v415 = vrot.slane %v405, %v414
    %v417 = vunpack.c.l.s4 1966171168
    %v418 = vunpack.c.0.s8 %v417
    %v419 = vlaneseq
    %v420 = vshrl.u32 %v419, 7
    %v421 = vsub.s32 %v418, %v420
    %v422 = vrot.slane %v406, %v421
    %v424 = vunpack.c.l.s4 1966171168
    %v425 = vunpack.c.0.s8 %v424
    %v426 = vlaneseq
    %v427 = vshrl.u32 %v426, 7
    %v428 = vsub.s32 %v425, %v427
    %v429 = vrot.slane %v407, %v428
    %v431 = vunpack.c.l.s4 1966171168
    %v432 = vunpack.c.0.s8 %v431
    %v433 = vlaneseq
    %v434 = vshrl.u32 %v433, 7
    %v435 = vsub.s32 %v432, %v434
    %v436 = vrot.slane %v408, %v435
    %v437 = vcombine.low %v415, %v422
    %v438 = vcombine.low %v429, %v436
    %v440 = vunpack.c.l.s4 1966171168
    %v441 = vunpack.c.0.s8 %v440
    %v442 = vlaneseq
    %v443 = vshrl.u32 %v442, 7
    %v444 = vsub.s32 %v441, %v443
    %v445 = vrot.slane %v437, %v444
    %v447 = vunpack.c.l.s4 1966171168
    %v448 = vunpack.c.0.s8 %v447
    %v449 = vlaneseq
    %v450 = vshrl.u32 %v449, 7
    %v451 = vsub.s32 %v448, %v450
    %v452 = vrot.slane %v438, %v451
    %v453 = vcombine.low %v445, %v452
    %456 = vst [vmem:[#allocation7] sm:$0xff] %v404
    %457 = vst [vmem:[#allocation7 + $0x8] sm:$0xff] %v453
    // Predicated region
    $region10: #{tpu_custom_call.1} parent=1 // pred_check
      _
    $region11: #{tpu_custom_call.1} parent=1 // pred_check_branch
      %459 = sbr.rel (0) target = $region13
    $region12: #{tpu_custom_call.1} parent=1 // pred_region
      %s461 = ssub.s32 256, 256
      %462 = vsyncadd [#allocation6], %s461
      %s464 = sshll.u32 [#allocation7], 4
      %s465 = int_to_ptr.vmem [resolvable:$true] %s464
      %467 = dma.vmem_to_hbm [thread:$0]  %s465, 256, %s2, [#allocation6]
    $region13: #{tpu_custom_call.1} parent=1 // pred_fallthru
      _
    // Predicated region
    $region14: #{tpu_custom_call.1} parent=1 // pred_check
      _
    $region15: #{tpu_custom_call.1} parent=1 // pred_check_branch
      %469 = sbr.rel (0) target = $region17
    $region16: #{tpu_custom_call.1} parent=1 // pred_region
      %470 = dma.done [#allocation6], 256
    $region17: #{tpu_custom_call.1} parent=1 // pred_fallthru
      _
    %471 = vsyncpa [#allocation5], 1
    %472 = vsyncpa [#allocation6], 1

</llo_original>
